<compile_context>
chip_gen: v7x
topology: tpu7x:2x2x1
jax: 0.10.0
libtpu: 0.0.40
codegen_flags: <defaults>
</compile_context>

<pallas_src>
import functools

import jax
import jax.numpy as jnp
from jax.experimental import pallas as pl
from jax.experimental.pallas import tpu as pltpu


LANE = 128
SUBLANE = 8


def _round_up(n, m):
    return ((n + m - 1) // m) * m


# ---------------------------------------------------------------------------
# Fused kernel: both GCN branches, one grid-less pallas_call, 3 input DMAs.
# ---------------------------------------------------------------------------
def fused_gcn_kernel(a_ref, x_ref, p_ref, out_ref, *, offs, f_in, width):
    """3-layer fused GCN: relu(A(xW1)+b1) -> relu(A(.W2)+b2) -> A(.W3)+b3.

    W1 = [W1_p | W1_v]; W2, W3 are block-diagonal over the two branches, so
    the policy / value paths stay mathematically independent while sharing
    every matmul.  All parameters live in one packed (rows, width) slab and
    are addressed with static, 8-row-aligned ref slices.
    """
    r_w1, r_b1, r_w2, r_b2, r_w3, r_b3 = offs

    a = a_ref[...]

    # Static slices into the packed parameter slab (zero runtime cost).
    w1 = p_ref[r_w1:r_w1 + f_in, :]
    b1 = p_ref[r_b1:r_b1 + 1, :]
    w2 = p_ref[r_w2:r_w2 + width, :]
    b2 = p_ref[r_b2:r_b2 + 1, :]
    w3 = p_ref[r_w3:r_w3 + width, :]
    b3 = p_ref[r_b3:r_b3 + 1, :]

    # layer 1: aggregate-then-transform (N << F_out -> fewer MXU passes)
    h = jnp.dot(jnp.dot(a, x_ref[...], preferred_element_type=jnp.float32),
                w1, preferred_element_type=jnp.float32) + b1
    h = jnp.maximum(h, 0.0)

    # layer 2: square hidden width; A @ (h @ W2)
    h = jnp.dot(a, jnp.dot(h, w2, preferred_element_type=jnp.float32),
                preferred_element_type=jnp.float32) + b2
    h = jnp.maximum(h, 0.0)

    # output layer: aggregate-then-transform, lane-dense (width % 128 == 0)
    out_ref[...] = jnp.dot(
        jnp.dot(a, h, preferred_element_type=jnp.float32),
        w3, preferred_element_type=jnp.float32) + b3


def fused_gcn_call(a_hat, x, slab, offs, f_in, width):
    """Single grid-less pallas_call for both branches; returns (N, width)."""
    n = x.shape[0]
    kernel = functools.partial(fused_gcn_kernel, offs=offs, f_in=f_in,
                               width=width)
    vmem = pl.BlockSpec(memory_space=pltpu.MemorySpace.VMEM)
    return pl.pallas_call(
        kernel,
        out_shape=jax.ShapeDtypeStruct((n, width), jnp.float32),
        in_specs=[vmem, vmem, vmem],
        out_specs=vmem,
    )(a_hat, x, slab)


# ---------------------------------------------------------------------------
# Parameter packing: one pre-padded (rows, 128) slab for both branches.
# ---------------------------------------------------------------------------
def fuse_branch_params(p_params, v_params):
    """Pack (policy, value) params into one lane-padded slab.

    Returns (slab, offs, f_in, width, out_p, out_v).  Kernel output columns:
    [0:out_p] = policy logits, [out_p:out_p+out_v] = value, rest zero padding.
    """
    w1p, b1p, w2p, b2p, w3p, b3p = p_params
    w1v, b1v, w2v, b2v, w3v, b3v = v_params

    f_in = w1p.shape[0]
    h1p, h1v = w1p.shape[1], w1v.shape[1]
    h2p, h2v = w2p.shape[1], w2v.shape[1]
    out_p, out_v = w3p.shape[1], w3v.shape[1]
    h1, h2, out_tot = h1p + h1v, h2p + h2v, out_p + out_v

    # Single lane-dense column width shared by all layers (<= 128 here).
    width = _round_up(max(h1, h2, out_tot), LANE)

    # 8-aligned row offsets for each parameter section.
    r_w1 = 0
    r_b1 = _round_up(f_in, SUBLANE)
    r_w2 = r_b1 + SUBLANE
    r_b2 = r_w2 + width
    r_w3 = r_b2 + SUBLANE
    r_b3 = r_w3 + width
    rows = _round_up(r_b3 + 1, SUBLANE)

    slab = jnp.zeros((rows, width), jnp.float32)
    # layer 1: column concat of the two branches
    slab = slab.at[r_w1:r_w1 + f_in, :h1p].set(w1p)
    slab = slab.at[r_w1:r_w1 + f_in, h1p:h1].set(w1v)
    slab = slab.at[r_b1, :h1p].set(b1p[0])
    slab = slab.at[r_b1, h1p:h1].set(b1v[0])
    # layer 2: block-diagonal
    slab = slab.at[r_w2:r_w2 + h1p, :h2p].set(w2p)
    slab = slab.at[r_w2 + h1p:r_w2 + h1, h2p:h2].set(w2v)
    slab = slab.at[r_b2, :h2p].set(b2p[0])
    slab = slab.at[r_b2, h2p:h2].set(b2v[0])
    # layer 3: block placement, zero-padded to the lane-dense output width
    slab = slab.at[r_w3:r_w3 + h2p, :out_p].set(w3p)
    slab = slab.at[r_w3 + h2p:r_w3 + h2, out_p:out_tot].set(w3v)
    slab = slab.at[r_b3, :out_p].set(b3p[0])
    slab = slab.at[r_b3, out_p:out_tot].set(b3v[0])

    offs = (r_w1, r_b1, r_w2, r_b2, r_w3, r_b3)
    return slab, offs, f_in, width, out_p, out_v


# ---------------------------------------------------------------------------
# Plain-JAX glue: adjacency normalization, parameter init, forward wrapper.
# ---------------------------------------------------------------------------
def build_normalized_adjacency(edge_index, num_nodes):
    """Dense D^{-1/2}(A + I)D^{-1/2} from a PyG-style edge_index [2, E].

    Uses scatter-ADD so duplicate edges accumulate weight, matching PyG's
    gcn_norm semantics.
    """
    src, dst = edge_index[0], edge_index[1]
    a = jnp.zeros((num_nodes, num_nodes), jnp.float32)
    # message flows src -> dst, so row = target, col = source
    a = a.at[dst, src].add(1.0)
    a = a + jnp.eye(num_nodes, dtype=jnp.float32)
    deg = a.sum(axis=1)
    d_inv_sqrt = jnp.where(deg > 0, 1.0 / jnp.sqrt(deg), 0.0)
    return d_inv_sqrt[:, None] * a * d_inv_sqrt[None, :]
    # TODO(synk): for sparse graphs at large N, replace the dense A_hat with a
    # scalar-prefetched neighbor-index gather-accumulate instead of O(N^2).


def glorot(key, fan_in, fan_out):
    limit = jnp.sqrt(6.0 / (fan_in + fan_out))
    return jax.random.uniform(key, (fan_in, fan_out), jnp.float32,
                              minval=-limit, maxval=limit)


def init_gcn_params(key, ob_dim, policy_out_dim, policy_size, vf_size):
    keys = jax.random.split(key, 6)

    def branch(ks, dims):
        ps = []
        for k, (fi, fo) in zip(ks, dims):
            ps.append(glorot(k, fi, fo))
            ps.append(jnp.zeros((1, fo), jnp.float32))
        return tuple(ps)

    p_dims = [(ob_dim, policy_size[0]),
              (policy_size[0], policy_size[1]),
              (policy_size[1], policy_out_dim)]
    v_dims = [(ob_dim, vf_size[0]),
              (vf_size[0], vf_size[1]),
              (vf_size[1], 1)]
    return branch(keys[:3], p_dims), branch(keys[3:], v_dims)


def make_gcn_forward(offs, f_in, width, out_p, out_v, policy_out_dim,
                     discrete):
    """Returns a jitted forward: (x, edge_index, slab) -> (dist_params, v).

    The whole glue (adjacency build, kernel, output slicing) fuses into one
    executable; the param slab is packed once outside and passed in.
    """

    @jax.jit
    def forward(x, edge_index, slab):
        n = x.shape[0]
        a_hat = build_normalized_adjacency(edge_index, n)
        packed = fused_gcn_call(a_hat, x, slab, offs, f_in, width)
        action_logits = packed[:, :out_p]
        v = packed[:, out_p:out_p + out_v]
        if discrete:
            return (action_logits,), v
        half = policy_out_dim // 2
        mean = action_logits[:, :half]
        logstd = action_logits[:, half:]
        # TODO(synk): Normal/Categorical distribution objects have no Pallas
        # equivalent; we return their parameters instead.
        return (mean, logstd), v

    return forward


def _reference_branch(a_hat, x, params):
    """Plain-JAX reference for one 3-layer GCN branch (correctness check)."""
    w1, b1, w2, b2, w3, b3 = params
    h = jnp.maximum(a_hat @ (x @ w1) + b1, 0.0)
    h = jnp.maximum(a_hat @ (h @ w2) + b2, 0.0)
    return a_hat @ (h @ w3) + b3


if __name__ == "__main__":
    # Small shapes consistent with the module.
    N = 16                 # number of graph nodes
    OB_DIM = 8             # per-node observation features
    POLICY_SIZE = (32, 32)
    VF_SIZE = (32, 32)
    POLICY_OUT_DIM = 6
    DISCRETE = True

    key = jax.random.PRNGKey(0)
    k_x, k_params = jax.random.split(key)

    # node features
    x = jax.random.normal(k_x, (N, OB_DIM), jnp.float32)

    # ring graph, both directions (PyG edge_index format [2, E])
    src = jnp.arange(N, dtype=jnp.int32)
    dst = (src + 1) % N
    edge_index = jnp.stack([jnp.concatenate([src, dst]),
                            jnp.concatenate([dst, src])], axis=0)

    p_params, v_params = init_gcn_params(
        k_params, OB_DIM, POLICY_OUT_DIM, POLICY_SIZE, VF_SIZE)

    # One-time parameter packing, hoisted out of the per-step forward.
    slab, offs, f_in, width, out_p, out_v = fuse_branch_params(
        p_params, v_params)
    forward = make_gcn_forward(offs, f_in, width, out_p, out_v,
                               POLICY_OUT_DIM, DISCRETE)

    dist_params, v = forward(x, edge_index, slab)
    jax.block_until_ready((dist_params, v))

    assert dist_params[0].shape == (N, POLICY_OUT_DIM)
    assert v.shape == (N, 1)
    assert bool(jnp.all(jnp.isfinite(dist_params[0])))
    assert bool(jnp.all(jnp.isfinite(v)))

    # Check fused block-diagonal kernel against independent plain-JAX branches.
    a_hat = build_normalized_adjacency(edge_index, N)
    logits_ref = _reference_branch(a_hat, x, p_params)
    v_ref = _reference_branch(a_hat, x, v_params)
    assert jnp.allclose(dist_params[0], logits_ref, rtol=1e-3, atol=1e-3)
    assert jnp.allclose(v, v_ref, rtol=1e-3, atol=1e-3)

    print("KERNEL_OK")
</pallas_src>

<mosaic_0001>
module attributes {stable_mosaic.version = 11 : i64} {
  func.func private @main(%arg0: i32) attributes {dimension_semantics = [#tpu.dimension_semantics<core_parallel>], iteration_bounds = array<i64: 2>, tpu.core_type = #tpu.core_type<sc_scalar_subcore>, window_params = []} {
    return
  }
}

module attributes {stable_mosaic.version = 11 : i64} {
  func.func private @main(%arg0: i32) attributes {dimension_semantics = [#tpu.dimension_semantics<core_parallel>], iteration_bounds = array<i64: 2>, tpu.core_type = #tpu.core_type<sc_scalar_subcore>, window_params = []} {
    return
  }
}

module attributes {stable_mosaic.version = 11 : i64} {
  func.func @fused_gcn_kernel(%arg0: memref<16x16xf32, #tpu.memory_space<vmem>>, %arg1: memref<16x8xf32, #tpu.memory_space<vmem>>, %arg2: memref<288x128xf32, #tpu.memory_space<vmem>>, %arg3: memref<16x128xf32, #tpu.memory_space<vmem>>) attributes {dimension_semantics = [], scalar_prefetch = 0 : i64, scratch_operands = 0 : i64, tpu.core_type = #tpu.core_type<tc>} {
    %c0 = arith.constant 0 : index
    %c0_0 = arith.constant 0 : index
    %0 = vector.load %arg0[%c0, %c0_0] : memref<16x16xf32, #tpu.memory_space<vmem>>, vector<16x16xf32>
    %c0_1 = arith.constant 0 : index
    %c0_2 = arith.constant 0 : index
    %1 = vector.load %arg2[%c0_1, %c0_2] : memref<288x128xf32, #tpu.memory_space<vmem>>, vector<8x128xf32>
    %c8 = arith.constant 8 : index
    %c0_3 = arith.constant 0 : index
    %2 = vector.load %arg2[%c8, %c0_3] : memref<288x128xf32, #tpu.memory_space<vmem>>, vector<1x128xf32>
    %c16 = arith.constant 16 : index
    %c0_4 = arith.constant 0 : index
    %3 = vector.load %arg2[%c16, %c0_4] : memref<288x128xf32, #tpu.memory_space<vmem>>, vector<128x128xf32>
    %c144 = arith.constant 144 : index
    %c0_5 = arith.constant 0 : index
    %4 = vector.load %arg2[%c144, %c0_5] : memref<288x128xf32, #tpu.memory_space<vmem>>, vector<1x128xf32>
    %c152 = arith.constant 152 : index
    %c0_6 = arith.constant 0 : index
    %5 = vector.load %arg2[%c152, %c0_6] : memref<288x128xf32, #tpu.memory_space<vmem>>, vector<128x128xf32>
    %c280 = arith.constant 280 : index
    %c0_7 = arith.constant 0 : index
    %6 = vector.load %arg2[%c280, %c0_7] : memref<288x128xf32, #tpu.memory_space<vmem>>, vector<1x128xf32>
    %c0_8 = arith.constant 0 : index
    %c0_9 = arith.constant 0 : index
    %7 = vector.load %arg1[%c0_8, %c0_9] : memref<16x8xf32, #tpu.memory_space<vmem>>, vector<16x8xf32>
    %cst = arith.constant dense<0.000000e+00> : vector<16x8xf32>
    %8 = tpu.matmul %0, %7, %cst {dimension_numbers = #tpu.dot_dimension_numbers<[1], [0], [0], [1], [0, 0, 1, 1], [], []>} : vector<16x16xf32>, vector<16x8xf32>, vector<16x8xf32> -> vector<16x8xf32>
    %cst_10 = arith.constant dense<0.000000e+00> : vector<16x128xf32>
    %9 = tpu.matmul %8, %1, %cst_10 {dimension_numbers = #tpu.dot_dimension_numbers<[1], [0], [0], [1], [0, 0, 1, 1], [], []>} : vector<16x8xf32>, vector<8x128xf32>, vector<16x128xf32> -> vector<16x128xf32>
    %10 = vector.broadcast %2 : vector<1x128xf32> to vector<16x128xf32>
    %11 = arith.addf %9, %10 : vector<16x128xf32>
    %cst_11 = arith.constant 0.000000e+00 : f32
    %12 = vector.broadcast %cst_11 : f32 to vector<16x128xf32>
    %13 = arith.maximumf %11, %12 : vector<16x128xf32>
    %cst_12 = arith.constant dense<0.000000e+00> : vector<16x128xf32>
    %14 = tpu.matmul %13, %3, %cst_12 {dimension_numbers = #tpu.dot_dimension_numbers<[1], [0], [0], [1], [0, 0, 1, 1], [], []>} : vector<16x128xf32>, vector<128x128xf32>, vector<16x128xf32> -> vector<16x128xf32>
    %cst_13 = arith.constant dense<0.000000e+00> : vector<16x128xf32>
    %15 = tpu.matmul %0, %14, %cst_13 {dimension_numbers = #tpu.dot_dimension_numbers<[1], [0], [0], [1], [0, 0, 1, 1], [], []>} : vector<16x16xf32>, vector<16x128xf32>, vector<16x128xf32> -> vector<16x128xf32>
    %16 = vector.broadcast %4 : vector<1x128xf32> to vector<16x128xf32>
    %17 = arith.addf %15, %16 : vector<16x128xf32>
    %cst_14 = arith.constant 0.000000e+00 : f32
    %18 = vector.broadcast %cst_14 : f32 to vector<16x128xf32>
    %19 = arith.maximumf %17, %18 : vector<16x128xf32>
    %cst_15 = arith.constant dense<0.000000e+00> : vector<16x128xf32>
    %20 = tpu.matmul %0, %19, %cst_15 {dimension_numbers = #tpu.dot_dimension_numbers<[1], [0], [0], [1], [0, 0, 1, 1], [], []>} : vector<16x16xf32>, vector<16x128xf32>, vector<16x128xf32> -> vector<16x128xf32>
    %cst_16 = arith.constant dense<0.000000e+00> : vector<16x128xf32>
    %21 = tpu.matmul %20, %5, %cst_16 {dimension_numbers = #tpu.dot_dimension_numbers<[1], [0], [0], [1], [0, 0, 1, 1], [], []>} : vector<16x128xf32>, vector<128x128xf32>, vector<16x128xf32> -> vector<16x128xf32>
    %22 = vector.broadcast %6 : vector<1x128xf32> to vector<16x128xf32>
    %23 = arith.addf %21, %22 : vector<16x128xf32>
    %c0_17 = arith.constant 0 : index
    %c0_18 = arith.constant 0 : index
    %24 = vector.load %arg3[%c0_17, %c0_18] : memref<16x128xf32, #tpu.memory_space<vmem>>, vector<16x128xf32>
    tpu.vector_store %arg3[%c0_17, %c0_18], %23 {strides = array<i32>} : memref<16x128xf32, #tpu.memory_space<vmem>>, vector<16x128xf32>,
    return
  }
}

</mosaic_0001>

<llo_original>
// kernel: forward.1
$region0: #{forward.1}
  #allocation0 [shape = 'u32[]', space=smem, size = 0x4, offset = 0x4, fixed_abs, tag = 'smem constant byte address 0x4 - core index']
  #allocation1 [shape = 'u32[144,128]{1,0:T(1,128)}', space=vmem, size = 0x12000, scoped, tag = 'internal scratch']
  %s0 = inlined_call_operand.vmem [shape: f32[16,16], index: 0, kind: input, shape index: {}]
  %s1 = inlined_call_operand.vmem [shape: f32[16,8], index: 1, kind: input, shape index: {}]
  %s2 = inlined_call_operand.vmem [shape: f32[288,128], index: 2, kind: input, shape index: {}]
  %s3 = inlined_call_operand.vmem [shape: f32[16,128], index: 3, kind: output, shape index: {}]
  %s4 = sld [smem:[#allocation0]]
  $region22: #{forward.1} parent=0
    _
  %s6 = ssub.s32 1, %s4
  %s7 = scalar_select 0, %s6, %s4
  // Predicated region
  $region2: #{forward.1} parent=0 // pred_check
    _
  $region3: #{forward.1} parent=0 // pred_check_branch
    %9 = sbr.rel (0) target = $region5
  $region4: #{forward.1} parent=0 // pred_region
    _
  $region5: #{forward.1} parent=0 // pred_fallthru
    _
  // Predicated region
  $region6: #{forward.1} parent=0 // pred_check
    _
  $region7: #{forward.1} parent=0 // pred_check_branch
    %11 = sbr.rel (0) target = $region9
  $region8: #{forward.1} parent=0 // pred_region
    _
  $region9: #{forward.1} parent=0 // pred_fallthru
    _
  // Predicated region
  $region10: #{forward.1} parent=0 // pred_check
    _
  $region11: #{forward.1} parent=0 // pred_check_branch
    %13 = sbr.rel (0) target = $region13
  $region12: #{forward.1} parent=0 // pred_region
    _
  $region13: #{forward.1} parent=0 // pred_fallthru
    _
  %v14 = vld [vmem:[%s0] sm:$0xff]
  %v15 = vld [vmem:[%s0 + $0x8] sm:$0xff]
  %v16 = vld [vmem:[%s2] sm:$0xff]
  %v17 = vld [vmem:[%s2 + $0x8] sm:$0x1]
  %v18 = vld [vmem:[%s2 + $0x10] sm:$0xff]
  %v19 = vld [vmem:[%s2 + $0x18] sm:$0xff]
  %v20 = vld [vmem:[%s2 + $0x20] sm:$0xff]
  %v21 = vld [vmem:[%s2 + $0x28] sm:$0xff]
  %v22 = vld [vmem:[%s2 + $0x30] sm:$0xff]
  %v23 = vld [vmem:[%s2 + $0x38] sm:$0xff]
  %v24 = vld [vmem:[%s2 + $0x40] sm:$0xff]
  %v25 = vld [vmem:[%s2 + $0x48] sm:$0xff]
  %v26 = vld [vmem:[%s2 + $0x50] sm:$0xff]
  %v27 = vld [vmem:[%s2 + $0x58] sm:$0xff]
  %v28 = vld [vmem:[%s2 + $0x60] sm:$0xff]
  %v29 = vld [vmem:[%s2 + $0x68] sm:$0xff]
  %v30 = vld [vmem:[%s2 + $0x70] sm:$0xff]
  %v31 = vld [vmem:[%s2 + $0x78] sm:$0xff]
  %v32 = vld [vmem:[%s2 + $0x80] sm:$0xff]
  %v33 = vld [vmem:[%s2 + $0x88] sm:$0xff]
  %v34 = vld [vmem:[%s2 + $0x90] sm:$0x1]
  %v35 = vld [vmem:[%s2 + $0x98] sm:$0xff]
  %v36 = vld [vmem:[%s2 + $0xa0] sm:$0xff]
  %v37 = vld [vmem:[%s2 + $0xa8] sm:$0xff]
  %v38 = vld [vmem:[%s2 + $0xb0] sm:$0xff]
  %v39 = vld [vmem:[%s2 + $0xb8] sm:$0xff]
  %v40 = vld [vmem:[%s2 + $0xc0] sm:$0xff]
  %v41 = vld [vmem:[%s2 + $0xc8] sm:$0xff]
  %v42 = vld [vmem:[%s2 + $0xd0] sm:$0xff]
  %v43 = vld [vmem:[%s2 + $0xd8] sm:$0xff]
  %v44 = vld [vmem:[%s2 + $0xe0] sm:$0xff]
  %v45 = vld [vmem:[%s2 + $0xe8] sm:$0xff]
  %v46 = vld [vmem:[%s2 + $0xf0] sm:$0xff]
  %v47 = vld [vmem:[%s2 + $0xf8] sm:$0xff]
  %v48 = vld [vmem:[%s2 + $0x100] sm:$0xff]
  %v49 = vld [vmem:[%s2 + $0x108] sm:$0xff]
  %v50 = vld [vmem:[%s2 + $0x110] sm:$0xff]
  %v51 = vld [vmem:[%s2 + $0x118] sm:$0x1]
  %v52 = vld [vmem:[%s1] sm:$0xff]
  %v53 = vld [vmem:[%s1 + $0x8] sm:$0xff]
  %vm54 = vcmask 130048
  %v56 = vsel %vm54, %v14, 0
  %v59 = vsel %vm54, %v15, 0
  %61 = vmatprep.subr.mxu0 0.0
  %62 = vmatpush1.msra.mxu0 %v52
  %63 = vmatprep.subr.mxu0 0.0
  %64 = vmatpush1.msra.mxu0 %v53
  %65 = vmatprep.subr.mxu0 0.0
  %66 = vmatpush1.msra.mxu0 0.0
  %67 = vmatprep.subr.mxu0 0.0
  %68 = vmatpush1.msra.mxu0 0.0
  %69 = vmatprep.subr.mxu0 0.0
  %70 = vmatpush1.msra.mxu0 0.0
  %71 = vmatprep.subr.mxu0 0.0
  %72 = vmatpush1.msra.mxu0 0.0
  %73 = vmatprep.subr.mxu0 0.0
  %74 = vmatpush1.msra.mxu0 0.0
  %75 = vmatprep.subr.mxu0 0.0
  %76 = vmatpush1.msra.mxu0 0.0
  %77 = vmatprep.subr.mxu0 0.0
  %78 = vmatpush1.msra.mxu0 0.0
  %79 = vmatprep.subr.mxu0 0.0
  %80 = vmatpush1.msra.mxu0 0.0
  %81 = vmatprep.subr.mxu0 0.0
  %82 = vmatpush1.msra.mxu0 0.0
  %83 = vmatprep.subr.mxu0 0.0
  %84 = vmatpush1.msra.mxu0 0.0
  %85 = vmatprep.subr.mxu0 0.0
  %86 = vmatpush1.msra.mxu0 0.0
  %87 = vmatprep.subr.mxu0 0.0
  %88 = vmatpush1.msra.mxu0 0.0
  %89 = vmatprep.subr.mxu0 0.0
  %90 = vmatpush1.msra.mxu0 0.0
  %91 = vmatprep.subr.mxu0 0.0
  %92 = vmatpush1.msra.mxu0 0.0
  %93 = vmatprep.subr.mxu0 0.0
  %94 = vmatpush1.msra.mxu0 0.0
  %95 = vmatprep.subr.mxu0 0.0
  %96 = vmatpush1.msra.mxu0 0.0
  %97 = vmatprep.subr.mxu0 0.0
  %98 = vmatpush1.msra.mxu0 0.0
  %99 = vmatprep.subr.mxu0 0.0
  %100 = vmatpush1.msra.mxu0 0.0
  %101 = vmatprep.subr.mxu0 0.0
  %102 = vmatpush1.msra.mxu0 0.0
  %103 = vmatprep.subr.mxu0 0.0
  %104 = vmatpush1.msra.mxu0 0.0
  %105 = vmatprep.subr.mxu0 0.0
  %106 = vmatpush1.msra.mxu0 0.0
  %107 = vmatprep.subr.mxu0 0.0
  %108 = vmatpush1.msra.mxu0 0.0
  %109 = vmatprep.subr.mxu0 0.0
  %110 = vmatpush1.msra.mxu0 0.0
  %111 = vmatprep.subr.mxu0 0.0
  %112 = vmatpush1.msra.mxu0 0.0
  %113 = vmatprep.subr.mxu0 0.0
  %114 = vmatpush1.msra.mxu0 0.0
  %115 = vmatprep.subr.mxu0 0.0
  %116 = vmatpush1.msra.mxu0 0.0
  %117 = vmatprep.subr.mxu0 0.0
  %118 = vmatpush1.msra.mxu0 0.0
  %119 = vmatprep.subr.mxu0 0.0
  %120 = vmatpush1.msra.mxu0 0.0
  %121 = vmatprep.subr.mxu0 0.0
  %122 = vmatpush1.msra.mxu0 0.0
  %123 = vmatprep.subr.mxu0 0.0
  %124 = vmatpush1.msra.mxu0 0.0
  %125 = vmatprep.mubr.f32.mxu0 0.0
  %126 = vmatmul.mubr.f32.gmra.mrb[0].mxu0 %v56
  %v127 = vpop.f32.mrb[0].mxu0
  %v128 = vadd.f32 0.0, %v127
  %v129 = vpop.f32.mrb[0].mxu0
  %130 = vmatprep.mubr.f32.mxu0 0.0
  %131 = vmatmul.mubr.f32.gmra.mrb[0].mxu0 %v59
  %v132 = vpop.f32.mrb[0].mxu0
  %v133 = vadd.f32 0.0, %v132
  %v134 = vpop.f32.mrb[0].mxu0
  %135 = vdwg.mxu0
  %v136 = vlaneseq
  %v137 = vshrl.u32 %v136, 7
  %v138 = vsub.s32 0, %v137
  %v139 = vrot.slane %v17, %v138
  %vm140 = vcmask 64512
  %v142 = vsel %vm140, %v128, 0
  %v145 = vsel %vm140, %v133, 0
  %147 = vmatprep.subr.mxu0 0.0
  %148 = vmatpush1.msra.mxu0 %v16
  %149 = vmatprep.subr.mxu0 0.0
  %150 = vmatpush1.msra.mxu0 0.0
  %151 = vmatprep.subr.mxu0 0.0
  %152 = vmatpush1.msra.mxu0 0.0
  %153 = vmatprep.subr.mxu0 0.0
  %154 = vmatpush1.msra.mxu0 0.0
  %155 = vmatprep.subr.mxu0 0.0
  %156 = vmatpush1.msra.mxu0 0.0
  %157 = vmatprep.subr.mxu0 0.0
  %158 = vmatpush1.msra.mxu0 0.0
  %159 = vmatprep.subr.mxu0 0.0
  %160 = vmatpush1.msra.mxu0 0.0
  %161 = vmatprep.subr.mxu0 0.0
  %162 = vmatpush1.msra.mxu0 0.0
  %163 = vmatprep.subr.mxu0 0.0
  %164 = vmatpush1.msra.mxu0 0.0
  %165 = vmatprep.subr.mxu0 0.0
  %166 = vmatpush1.msra.mxu0 0.0
  %167 = vmatprep.subr.mxu0 0.0
  %168 = vmatpush1.msra.mxu0 0.0
  %169 = vmatprep.subr.mxu0 0.0
  %170 = vmatpush1.msra.mxu0 0.0
  %171 = vmatprep.subr.mxu0 0.0
  %172 = vmatpush1.msra.mxu0 0.0
  %173 = vmatprep.subr.mxu0 0.0
  %174 = vmatpush1.msra.mxu0 0.0
  %175 = vmatprep.subr.mxu0 0.0
  %176 = vmatpush1.msra.mxu0 0.0
  %177 = vmatprep.subr.mxu0 0.0
  %178 = vmatpush1.msra.mxu0 0.0
  %179 = vmatprep.subr.mxu0 0.0
  %180 = vmatpush1.msra.mxu0 0.0
  %181 = vmatprep.subr.mxu0 0.0
  %182 = vmatpush1.msra.mxu0 0.0
  %183 = vmatprep.subr.mxu0 0.0
  %184 = vmatpush1.msra.mxu0 0.0
  %185 = vmatprep.subr.mxu0 0.0
  %186 = vmatpush1.msra.mxu0 0.0
  %187 = vmatprep.subr.mxu0 0.0
  %188 = vmatpush1.msra.mxu0 0.0
  %189 = vmatprep.subr.mxu0 0.0
  %190 = vmatpush1.msra.mxu0 0.0
  %191 = vmatprep.subr.mxu0 0.0
  %192 = vmatpush1.msra.mxu0 0.0
  %193 = vmatprep.subr.mxu0 0.0
  %194 = vmatpush1.msra.mxu0 0.0
  %195 = vmatprep.subr.mxu0 0.0
  %196 = vmatpush1.msra.mxu0 0.0
  %197 = vmatprep.subr.mxu0 0.0
  %198 = vmatpush1.msra.mxu0 0.0
  %199 = vmatprep.subr.mxu0 0.0
  %200 = vmatpush1.msra.mxu0 0.0
  %201 = vmatprep.subr.mxu0 0.0
  %202 = vmatpush1.msra.mxu0 0.0
  %203 = vmatprep.subr.mxu0 0.0
  %204 = vmatpush1.msra.mxu0 0.0
  %205 = vmatprep.subr.mxu0 0.0
  %206 = vmatpush1.msra.mxu0 0.0
  %207 = vmatprep.subr.mxu0 0.0
  %208 = vmatpush1.msra.mxu0 0.0
  %209 = vmatprep.subr.mxu0 0.0
  %210 = vmatpush1.msra.mxu0 0.0
  %211 = vmatprep.mubr.f32.mxu0 0.0
  %212 = vmatmul.mubr.f32.gmra.mrb[0].mxu0 %v142
  %v213 = vpop.f32.mrb[0].mxu0
  %v214 = vadd.f32 %v139, %v213
  %v215 = vpop.f32.mrb[0].mxu0
  %216 = vmatprep.mubr.f32.mxu0 0.0
  %217 = vmatmul.mubr.f32.gmra.mrb[0].mxu0 %v145
  %v218 = vpop.f32.mrb[0].mxu0
  %v219 = vadd.f32 %v139, %v218
  %v220 = vpop.f32.mrb[0].mxu0
  %221 = vdwg.mxu0
  %v222 = vmax.f32 %v214, 0.0
  %v223 = vmax.f32 %v219, 0.0
  %224 = vmatprep.subr.mxu0 0.0
  %225 = vmatpush1.msra.mxu0 %v18
  %226 = vmatprep.subr.mxu0 0.0
  %227 = vmatpush1.msra.mxu0 %v19
  %228 = vmatprep.subr.mxu0 0.0
  %229 = vmatpush1.msra.mxu0 %v20
  %230 = vmatprep.subr.mxu0 0.0
  %231 = vmatpush1.msra.mxu0 %v21
  %232 = vmatprep.subr.mxu0 0.0
  %233 = vmatpush1.msra.mxu0 %v22
  %234 = vmatprep.subr.mxu0 0.0
  %235 = vmatpush1.msra.mxu0 %v23
  %236 = vmatprep.subr.mxu0 0.0
  %237 = vmatpush1.msra.mxu0 %v24
  %238 = vmatprep.subr.mxu0 0.0
  %239 = vmatpush1.msra.mxu0 %v25
  %240 = vmatprep.subr.mxu0 0.0
  %241 = vmatpush1.msra.mxu0 %v26
  %242 = vmatprep.subr.mxu0 0.0
  %243 = vmatpush1.msra.mxu0 %v27
  %244 = vmatprep.subr.mxu0 0.0
  %245 = vmatpush1.msra.mxu0 %v28
  %246 = vmatprep.subr.mxu0 0.0
  %247 = vmatpush1.msra.mxu0 %v29
  %248 = vmatprep.subr.mxu0 0.0
  %249 = vmatpush1.msra.mxu0 %v30
  %250 = vmatprep.subr.mxu0 0.0
  %251 = vmatpush1.msra.mxu0 %v31
  %252 = vmatprep.subr.mxu0 0.0
  %253 = vmatpush1.msra.mxu0 %v32
  %254 = vmatprep.subr.mxu0 0.0
  %255 = vmatpush1.msra.mxu0 %v33
  %256 = vmatprep.subr.mxu0 0.0
  %257 = vmatpush1.msra.mxu0 0.0
  %258 = vmatprep.subr.mxu0 0.0
  %259 = vmatpush1.msra.mxu0 0.0
  %260 = vmatprep.subr.mxu0 0.0
  %261 = vmatpush1.msra.mxu0 0.0
  %262 = vmatprep.subr.mxu0 0.0
  %263 = vmatpush1.msra.mxu0 0.0
  %264 = vmatprep.subr.mxu0 0.0
  %265 = vmatpush1.msra.mxu0 0.0
  %266 = vmatprep.subr.mxu0 0.0
  %267 = vmatpush1.msra.mxu0 0.0
  %268 = vmatprep.subr.mxu0 0.0
  %269 = vmatpush1.msra.mxu0 0.0
  %270 = vmatprep.subr.mxu0 0.0
  %271 = vmatpush1.msra.mxu0 0.0
  %272 = vmatprep.subr.mxu0 0.0
  %273 = vmatpush1.msra.mxu0 0.0
  %274 = vmatprep.subr.mxu0 0.0
  %275 = vmatpush1.msra.mxu0 0.0
  %276 = vmatprep.subr.mxu0 0.0
  %277 = vmatpush1.msra.mxu0 0.0
  %278 = vmatprep.subr.mxu0 0.0
  %279 = vmatpush1.msra.mxu0 0.0
  %280 = vmatprep.subr.mxu0 0.0
  %281 = vmatpush1.msra.mxu0 0.0
  %282 = vmatprep.subr.mxu0 0.0
  %283 = vmatpush1.msra.mxu0 0.0
  %284 = vmatprep.subr.mxu0 0.0
  %285 = vmatpush1.msra.mxu0 0.0
  %286 = vmatprep.subr.mxu0 0.0
  %287 = vmatpush1.msra.mxu0 0.0
  %288 = vmatprep.mubr.f32.mxu0 0.0
  %289 = vmatmul.mubr.f32.gmra.mrb[0].mxu0 %v222
  %v290 = vpop.f32.mrb[0].mxu0
  %v291 = vadd.f32 0.0, %v290
  %v292 = vpop.f32.mrb[0].mxu0
  %293 = vmatprep.mubr.f32.mxu0 0.0
  %294 = vmatmul.mubr.f32.gmra.mrb[0].mxu0 %v223
  %v295 = vpop.f32.mrb[0].mxu0
  %v296 = vadd.f32 0.0, %v295
  %v297 = vpop.f32.mrb[0].mxu0
  %298 = vdwg.mxu0
  %v299 = vlaneseq
  %v300 = vshrl.u32 %v299, 7
  %v301 = vsub.s32 0, %v300
  %v302 = vrot.slane %v34, %v301
  %303 = vmatprep.subr.mxu0 0.0
  %304 = vmatpush1.msra.mxu0 %v291
  %305 = vmatprep.subr.mxu0 0.0
  %306 = vmatpush1.msra.mxu0 %v296
  %307 = vmatprep.subr.mxu0 0.0
  %308 = vmatpush1.msra.mxu0 0.0
  %309 = vmatprep.subr.mxu0 0.0
  %310 = vmatpush1.msra.mxu0 0.0
  %311 = vmatprep.subr.mxu0 0.0
  %312 = vmatpush1.msra.mxu0 0.0
  %313 = vmatprep.subr.mxu0 0.0
  %314 = vmatpush1.msra.mxu0 0.0
  %315 = vmatprep.subr.mxu0 0.0
  %316 = vmatpush1.msra.mxu0 0.0
  %317 = vmatprep.subr.mxu0 0.0
  %318 = vmatpush1.msra.mxu0 0.0
  %319 = vmatprep.subr.mxu0 0.0
  %320 = vmatpush1.msra.mxu0 0.0
  %321 = vmatprep.subr.mxu0 0.0
  %322 = vmatpush1.msra.mxu0 0.0
  %323 = vmatprep.subr.mxu0 0.0
  %324 = vmatpush1.msra.mxu0 0.0
  %325 = vmatprep.subr.mxu0 0.0
  %326 = vmatpush1.msra.mxu0 0.0
  %327 = vmatprep.subr.mxu0 0.0
  %328 = vmatpush1.msra.mxu0 0.0
  %329 = vmatprep.subr.mxu0 0.0
  %330 = vmatpush1.msra.mxu0 0.0
  %331 = vmatprep.subr.mxu0 0.0
  %332 = vmatpush1.msra.mxu0 0.0
  %333 = vmatprep.subr.mxu0 0.0
  %334 = vmatpush1.msra.mxu0 0.0
  %335 = vmatprep.subr.mxu0 0.0
  %336 = vmatpush1.msra.mxu0 0.0
  %337 = vmatprep.subr.mxu0 0.0
  %338 = vmatpush1.msra.mxu0 0.0
  %339 = vmatprep.subr.mxu0 0.0
  %340 = vmatpush1.msra.mxu0 0.0
  %341 = vmatprep.subr.mxu0 0.0
  %342 = vmatpush1.msra.mxu0 0.0
  %343 = vmatprep.subr.mxu0 0.0
  %344 = vmatpush1.msra.mxu0 0.0
  %345 = vmatprep.subr.mxu0 0.0
  %346 = vmatpush1.msra.mxu0 0.0
  %347 = vmatprep.subr.mxu0 0.0
  %348 = vmatpush1.msra.mxu0 0.0
  %349 = vmatprep.subr.mxu0 0.0
  %350 = vmatpush1.msra.mxu0 0.0
  %351 = vmatprep.subr.mxu0 0.0
  %352 = vmatpush1.msra.mxu0 0.0
  %353 = vmatprep.subr.mxu0 0.0
  %354 = vmatpush1.msra.mxu0 0.0
  %355 = vmatprep.subr.mxu0 0.0
  %356 = vmatpush1.msra.mxu0 0.0
  %357 = vmatprep.subr.mxu0 0.0
  %358 = vmatpush1.msra.mxu0 0.0
  %359 = vmatprep.subr.mxu0 0.0
  %360 = vmatpush1.msra.mxu0 0.0
  %361 = vmatprep.subr.mxu0 0.0
  %362 = vmatpush1.msra.mxu0 0.0
  %363 = vmatprep.subr.mxu0 0.0
  %364 = vmatpush1.msra.mxu0 0.0
  %365 = vmatprep.subr.mxu0 0.0
  %366 = vmatpush1.msra.mxu0 0.0
  %367 = vmatprep.mubr.f32.mxu0 0.0
  %368 = vmatmul.mubr.f32.gmra.mrb[0].mxu0 %v56
  %v369 = vpop.f32.mrb[0].mxu0
  %v370 = vadd.f32 %v302, %v369
  %v371 = vpop.f32.mrb[0].mxu0
  %372 = vmatprep.mubr.f32.mxu0 0.0
  %373 = vmatmul.mubr.f32.gmra.mrb[0].mxu0 %v59
  %v374 = vpop.f32.mrb[0].mxu0
  %v375 = vadd.f32 %v302, %v374
  %v376 = vpop.f32.mrb[0].mxu0
  %377 = vdwg.mxu0
  %v378 = vmax.f32 %v370, 0.0
  %v379 = vmax.f32 %v375, 0.0
  %380 = vmatprep.subr.mxu0 0.0
  %381 = vmatpush1.msra.mxu0 %v378
  %382 = vmatprep.subr.mxu0 0.0
  %383 = vmatpush1.msra.mxu0 %v379
  %384 = vmatprep.subr.mxu0 0.0
  %385 = vmatpush1.msra.mxu0 0.0
  %386 = vmatprep.subr.mxu0 0.0
  %387 = vmatpush1.msra.mxu0 0.0
  %388 = vmatprep.subr.mxu0 0.0
  %389 = vmatpush1.msra.mxu0 0.0
  %390 = vmatprep.subr.mxu0 0.0
  %391 = vmatpush1.msra.mxu0 0.0
  %392 = vmatprep.subr.mxu0 0.0
  %393 = vmatpush1.msra.mxu0 0.0
  %394 = vmatprep.subr.mxu0 0.0
  %395 = vmatpush1.msra.mxu0 0.0
  %396 = vmatprep.subr.mxu0 0.0
  %397 = vmatpush1.msra.mxu0 0.0
  %398 = vmatprep.subr.mxu0 0.0
  %399 = vmatpush1.msra.mxu0 0.0
  %400 = vmatprep.subr.mxu0 0.0
  %401 = vmatpush1.msra.mxu0 0.0
  %402 = vmatprep.subr.mxu0 0.0
  %403 = vmatpush1.msra.mxu0 0.0
  %404 = vmatprep.subr.mxu0 0.0
  %405 = vmatpush1.msra.mxu0 0.0
  %406 = vmatprep.subr.mxu0 0.0
  %407 = vmatpush1.msra.mxu0 0.0
  %408 = vmatprep.subr.mxu0 0.0
  %409 = vmatpush1.msra.mxu0 0.0
  %410 = vmatprep.subr.mxu0 0.0
  %411 = vmatpush1.msra.mxu0 0.0
  %412 = vmatprep.subr.mxu0 0.0
  %413 = vmatpush1.msra.mxu0 0.0
  %414 = vmatprep.subr.mxu0 0.0
  %415 = vmatpush1.msra.mxu0 0.0
  %416 = vmatprep.subr.mxu0 0.0
  %417 = vmatpush1.msra.mxu0 0.0
  %418 = vmatprep.subr.mxu0 0.0
  %419 = vmatpush1.msra.mxu0 0.0
  %420 = vmatprep.subr.mxu0 0.0
  %421 = vmatpush1.msra.mxu0 0.0
  %422 = vmatprep.subr.mxu0 0.0
  %423 = vmatpush1.msra.mxu0 0.0
  %424 = vmatprep.subr.mxu0 0.0
  %425 = vmatpush1.msra.mxu0 0.0
  %426 = vmatprep.subr.mxu0 0.0
  %427 = vmatpush1.msra.mxu0 0.0
  %428 = vmatprep.subr.mxu0 0.0
  %429 = vmatpush1.msra.mxu0 0.0
  %430 = vmatprep.subr.mxu0 0.0
  %431 = vmatpush1.msra.mxu0 0.0
  %432 = vmatprep.subr.mxu0 0.0
  %433 = vmatpush1.msra.mxu0 0.0
  %434 = vmatprep.subr.mxu0 0.0
  %435 = vmatpush1.msra.mxu0 0.0
  %436 = vmatprep.subr.mxu0 0.0
  %437 = vmatpush1.msra.mxu0 0.0
  %438 = vmatprep.subr.mxu0 0.0
  %439 = vmatpush1.msra.mxu0 0.0
  %440 = vmatprep.subr.mxu0 0.0
  %441 = vmatpush1.msra.mxu0 0.0
  %442 = vmatprep.subr.mxu0 0.0
  %443 = vmatpush1.msra.mxu0 0.0
  %444 = vmatprep.mubr.f32.mxu0 0.0
  %445 = vmatmul.mubr.f32.gmra.mrb[0].mxu0 %v56
  %v446 = vpop.f32.mrb[0].mxu0
  %v447 = vadd.f32 0.0, %v446
  %v448 = vpop.f32.mrb[0].mxu0
  %449 = vmatprep.mubr.f32.mxu0 0.0
  %450 = vmatmul.mubr.f32.gmra.mrb[0].mxu0 %v59
  %v451 = vpop.f32.mrb[0].mxu0
  %v452 = vadd.f32 0.0, %v451
  %v453 = vpop.f32.mrb[0].mxu0
  %454 = vdwg.mxu0
  %v455 = vlaneseq
  %v456 = vshrl.u32 %v455, 7
  %v457 = vsub.s32 0, %v456
  %v458 = vrot.slane %v51, %v457
  %459 = vmatprep.subr.mxu0 0.0
  %460 = vmatpush1.msra.mxu0 %v35
  %461 = vmatprep.subr.mxu0 0.0
  %462 = vmatpush1.msra.mxu0 %v36
  %463 = vmatprep.subr.mxu0 0.0
  %464 = vmatpush1.msra.mxu0 %v37
  %465 = vmatprep.subr.mxu0 0.0
  %466 = vmatpush1.msra.mxu0 %v38
  %467 = vmatprep.subr.mxu0 0.0
  %468 = vmatpush1.msra.mxu0 %v39
  %469 = vmatprep.subr.mxu0 0.0
  %470 = vmatpush1.msra.mxu0 %v40
  %471 = vmatprep.subr.mxu0 0.0
  %472 = vmatpush1.msra.mxu0 %v41
  %473 = vmatprep.subr.mxu0 0.0
  %474 = vmatpush1.msra.mxu0 %v42
  %475 = vmatprep.subr.mxu0 0.0
  %476 = vmatpush1.msra.mxu0 %v43
  %477 = vmatprep.subr.mxu0 0.0
  %478 = vmatpush1.msra.mxu0 %v44
  %479 = vmatprep.subr.mxu0 0.0
  %480 = vmatpush1.msra.mxu0 %v45
  %481 = vmatprep.subr.mxu0 0.0
  %482 = vmatpush1.msra.mxu0 %v46
  %483 = vmatprep.subr.mxu0 0.0
  %484 = vmatpush1.msra.mxu0 %v47
  %485 = vmatprep.subr.mxu0 0.0
  %486 = vmatpush1.msra.mxu0 %v48
  %487 = vmatprep.subr.mxu0 0.0
  %488 = vmatpush1.msra.mxu0 %v49
  %489 = vmatprep.subr.mxu0 0.0
  %490 = vmatpush1.msra.mxu0 %v50
  %491 = vmatprep.subr.mxu0 0.0
  %492 = vmatpush1.msra.mxu0 0.0
  %493 = vmatprep.subr.mxu0 0.0
  %494 = vmatpush1.msra.mxu0 0.0
  %495 = vmatprep.subr.mxu0 0.0
  %496 = vmatpush1.msra.mxu0 0.0
  %497 = vmatprep.subr.mxu0 0.0
  %498 = vmatpush1.msra.mxu0 0.0
  %499 = vmatprep.subr.mxu0 0.0
  %500 = vmatpush1.msra.mxu0 0.0
  %501 = vmatprep.subr.mxu0 0.0
  %502 = vmatpush1.msra.mxu0 0.0
  %503 = vmatprep.subr.mxu0 0.0
  %504 = vmatpush1.msra.mxu0 0.0
  %505 = vmatprep.subr.mxu0 0.0
  %506 = vmatpush1.msra.mxu0 0.0
  %507 = vmatprep.subr.mxu0 0.0
  %508 = vmatpush1.msra.mxu0 0.0
  %509 = vmatprep.subr.mxu0 0.0
  %510 = vmatpush1.msra.mxu0 0.0
  %511 = vmatprep.subr.mxu0 0.0
  %512 = vmatpush1.msra.mxu0 0.0
  %513 = vmatprep.subr.mxu0 0.0
  %514 = vmatpush1.msra.mxu0 0.0
  %515 = vmatprep.subr.mxu0 0.0
  %516 = vmatpush1.msra.mxu0 0.0
  %517 = vmatprep.subr.mxu0 0.0
  %518 = vmatpush1.msra.mxu0 0.0
  %519 = vmatprep.subr.mxu0 0.0
  %520 = vmatpush1.msra.mxu0 0.0
  %521 = vmatprep.subr.mxu0 0.0
  %522 = vmatpush1.msra.mxu0 0.0
  %523 = vmatprep.mubr.f32.mxu0 0.0
  %524 = vmatmul.mubr.f32.gmra.mrb[0].mxu0 %v447
  %v525 = vpop.f32.mrb[0].mxu0
  %v526 = vadd.f32 %v458, %v525
  %v527 = vpop.f32.mrb[0].mxu0
  %528 = vmatprep.mubr.f32.mxu0 0.0
  %529 = vmatmul.mubr.f32.gmra.mrb[0].mxu0 %v452
  %v530 = vpop.f32.mrb[0].mxu0
  %v531 = vadd.f32 %v458, %v530
  %v532 = vpop.f32.mrb[0].mxu0
  %533 = vdwg.mxu0
  %534 = vst [vmem:[%s3] sm:$0xff] %v526
  %535 = vst [vmem:[%s3 + $0x8] sm:$0xff] %v531
  // Predicated region
  $region14: #{forward.1} parent=0 // pred_check
    _
  $region15: #{forward.1} parent=0 // pred_check_branch
    %537 = sbr.rel (0) target = $region17
  $region16: #{forward.1} parent=0 // pred_region
    _
  $region17: #{forward.1} parent=0 // pred_fallthru
    _
  // Predicated region
  $region18: #{forward.1} parent=0 // pred_check
    _
  $region19: #{forward.1} parent=0 // pred_check_branch
    %539 = sbr.rel (0) target = $region21
  $region20: #{forward.1} parent=0 // pred_region
    _
  $region21: #{forward.1} parent=0 // pred_fallthru
    _

</llo_original>
